<compile_context>
chip_gen: v5e
topology: v5e:2x2
jax: 0.10.0
libtpu: 0.0.40
codegen_flags: <defaults>
</compile_context>

<pallas_src>
import functools

import jax
import jax.numpy as jnp
import numpy as np
from jax.experimental import pallas as pl
from jax.experimental.pallas import tpu as pltpu

_LANES = 128


def _project_points_kernel(m_ref, pts_ref, gx_ref, gy_ref, depth_ref, *,
                           eps, homogeneous):
    """Project one (tr, 128) slab of points for one batch element.

    m_ref:   (b, 12) SMEM = [(2/(w-1)*K0 @ T)[4], (2/(h-1)*K1 @ T)[4], T row2 [4]]
    pts_ref: (1, C, tr, 128) VMEM tile of the pointcloud (C = 3 or 4).
    gx/gy/depth: (1, tr, 128) dense f32 VMEM output tiles.
    """
    b = pl.program_id(0)

    # Per-plane casts: no whole-tile f32 temporary for bf16/f16 callers.
    p0 = pts_ref[0, 0].astype(jnp.float32)
    p1 = pts_ref[0, 1].astype(jnp.float32)
    p2 = pts_ref[0, 2].astype(jnp.float32)

    if homogeneous:
        # Caller guarantees pts[:, 3] == 1: fold column 3 in as additive
        # constants; channel 3 is never DMA'd.
        z = (m_ref[b, 8] * p0 + m_ref[b, 9] * p1 +
             m_ref[b, 10] * p2 + m_ref[b, 11])
        px = (m_ref[b, 0] * p0 + m_ref[b, 1] * p1 +
              m_ref[b, 2] * p2 + m_ref[b, 3])
        py = (m_ref[b, 4] * p0 + m_ref[b, 5] * p1 +
              m_ref[b, 6] * p2 + m_ref[b, 7])
    else:
        p3 = pts_ref[0, 3].astype(jnp.float32)
        z = (m_ref[b, 8] * p0 + m_ref[b, 9] * p1 +
             m_ref[b, 10] * p2 + m_ref[b, 11] * p3)
        px = (m_ref[b, 0] * p0 + m_ref[b, 1] * p1 +
              m_ref[b, 2] * p2 + m_ref[b, 3] * p3)
        py = (m_ref[b, 4] * p0 + m_ref[b, 5] * p1 +
              m_ref[b, 6] * p2 + m_ref[b, 7] * p3)

    depth_ref[0] = jnp.maximum(z, eps)            # pts[:, 2:].clamp(min=eps)
    # One reciprocal replaces the reference's three per-element divides;
    # clamp(depth, 0.1) == clamp(z, 0.1) since 0.1 > eps.
    inv = pl.reciprocal(jnp.maximum(z, 0.1), approx=False)
    gx_ref[0] = px * inv - 1.0
    gy_ref[0] = py * inv - 1.0


def _choose_tiling(rows, b, rows_per_tile):
    """Pick (rows_per_block, padded_rows) for the (rows, 128) point slab."""
    rows_per_tile = max(8, rows_per_tile - rows_per_tile % 8)
    if rows <= rows_per_tile:
        # Whole slab in one block per batch. If that would leave a 1-step grid
        # (b == 1), split the rows axis so both megacore TCs get work.
        if b == 1 and rows >= 16 and rows % 16 == 0:
            return rows // 2, rows
        return rows, rows                    # full-extent block: always legal
    if rows % 8 == 0:
        # Largest 8-aligned divisor of rows <= rows_per_tile: no padding pass,
        # no output slices. Only accept reasonably large tiles.
        min_tr = min(256, rows_per_tile)
        for d in range(rows_per_tile, min_tr - 1, -8):
            if rows % d == 0:
                return d, rows
    # Fallback: pad the point axis (extra pass over inputs + output slices),
    # never a single giant block.
    tr = rows_per_tile
    rows_pad = -(-rows // tr) * tr
    return tr, rows_pad


def project_points(pts, K, T, shape, *, rows_per_tile=1024, homogeneous=False):
    """Pallas equivalent of ProjectPoints.forward.

    pts: (b, 4, h*w), K: (b, 4, 4), T: (b, 4, 4) or None.
    homogeneous=True asserts pts[:, 3] == 1 (skips 25% of the input DMA).
    Returns (grid (b, h, w, 2), depth (b, 1, h, w)).
    """
    h, w = shape
    b, four, n = pts.shape
    assert four == 4 and n == h * w

    if T is None:
        # TODO(synk): the upstream T=None branch keeps 4 channels (pts[:, 2:]
        # would be 2 rows), which looks like an upstream bug; we reproduce the
        # documented T-applied semantics with an identity transform instead.
        T = jnp.broadcast_to(jnp.eye(4, dtype=jnp.float32), (b, 4, 4))

    Kf = K.astype(jnp.float32)
    Tf = T.astype(jnp.float32)

    # Fold the [-1, 1] normalization into K, then compose with T (tiny
    # per-batch matmuls done once in XLA, not per point in the kernel).
    norm = jnp.array([[2.0 / (w - 1)], [2.0 / (h - 1)]], jnp.float32)  # (2, 1)
    k_scaled = Kf[:, :2, :3] * norm                                    # (b, 2, 3)
    kt = jnp.einsum("bij,bjk->bik", k_scaled, Tf[:, :3, :4])           # (b, 2, 4)
    t2 = Tf[:, 2:3, :4]                                                # (b, 1, 4)
    m = jnp.concatenate([kt, t2], axis=1).reshape(b, 12)               # (b, 12)

    # ---- sublane/lane-dense tiling of the point axis ---------------------
    rows = -(-n // _LANES)                       # ceil(n / 128)
    tr, rows_pad = _choose_tiling(rows, b, rows_per_tile)
    n_pad = rows_pad * _LANES
    if n_pad != n:
        pts = jnp.pad(pts, ((0, 0), (0, 0), (0, n_pad - n)))
    pts4 = pts.reshape(b, 4, rows_pad, _LANES)   # native dtype; cast in-kernel

    c_blk = 3 if homogeneous else 4              # channel-3 DMA skipped if homogeneous
    eps = float(jnp.finfo(jnp.float32).eps)
    kernel = functools.partial(_project_points_kernel, eps=eps,
                               homogeneous=homogeneous)

    step_bytes = (c_blk * tr * _LANES * pts4.dtype.itemsize
                  + 3 * tr * _LANES * 4)
    vmem_limit = int(max(32 * 1024 * 1024, min(48 * 1024 * 1024, 3 * step_bytes)))

    gx, gy, depth = pl.pallas_call(
        kernel,
        grid=(b, rows_pad // tr),
        in_specs=[
            pl.BlockSpec(memory_space=pltpu.MemorySpace.SMEM),          # m (b, 12)
            pl.BlockSpec((1, c_blk, tr, _LANES), lambda bi, ri: (bi, 0, ri, 0)),
        ],
        out_specs=[
            pl.BlockSpec((1, tr, _LANES), lambda bi, ri: (bi, ri, 0)),  # gx
            pl.BlockSpec((1, tr, _LANES), lambda bi, ri: (bi, ri, 0)),  # gy
            pl.BlockSpec((1, tr, _LANES), lambda bi, ri: (bi, ri, 0)),  # depth
        ],
        out_shape=(
            jax.ShapeDtypeStruct((b, rows_pad, _LANES), jnp.float32),
            jax.ShapeDtypeStruct((b, rows_pad, _LANES), jnp.float32),
            jax.ShapeDtypeStruct((b, rows_pad, _LANES), jnp.float32),
        ),
        compiler_params=pltpu.CompilerParams(
            dimension_semantics=("parallel", "parallel"),
            vmem_limit_bytes=vmem_limit),
    )(m, pts4)

    if n_pad != n:                               # only on the padded fallback path
        gx = gx.reshape(b, n_pad)[:, :n]
        gy = gy.reshape(b, n_pad)[:, :n]
        depth = depth.reshape(b, n_pad)[:, :n]
    gx = gx.reshape(b, h, w)
    gy = gy.reshape(b, h, w)
    depth = depth.reshape(b, 1, h, w)
    # TODO(synk): emitting the (x, y) lane interleave inside the kernel (so the
    # output is (b, h, w, 2) directly) needs a (tr,128,2)->(tr,256) riffle
    # reshape that Mosaic does not reliably lower; the interleave stays in XLA.
    grid = jnp.stack([gx, gy], axis=-1)          # (b, h, w, 2)
    return grid, depth


def project_points_ref(pts, K, T, shape):
    """Pure-JAX reference mirroring the PyTorch forward (T provided)."""
    h, w = shape
    b = pts.shape[0]
    p = jnp.einsum("bij,bjn->bin", T, pts)[:, :3]
    depth = jnp.maximum(p[:, 2:], jnp.finfo(jnp.float32).eps)
    pix = jnp.einsum("bij,bjn->bin", K[:, :3, :3],
                     p / jnp.maximum(depth, 0.1))[:, :2]
    depth = depth.reshape(b, 1, h, w)
    grid = pix.reshape(b, 2, h, w).transpose(0, 2, 3, 1)
    grid = grid.at[..., 0].divide(w - 1)
    grid = grid.at[..., 1].divide(h - 1)
    grid = (grid - 0.5) * 2
    return grid, depth


def _make_inputs(key, b, h, w):
    n = h * w
    k1, k2 = jax.random.split(key, 2)
    xyz = jax.random.normal(k1, (b, 3, n), dtype=jnp.float32)
    xyz = xyz.at[:, 2].add(3.0)
    pts = jnp.concatenate([xyz, jnp.ones((b, 1, n), jnp.float32)], axis=1)

    fx, fy, cx, cy = 0.9 * w, 1.1 * h, 0.5 * w, 0.5 * h
    K_single = jnp.array([[fx, 0.0, cx, 0.0],
                          [0.0, fy, cy, 0.0],
                          [0.0, 0.0, 1.0, 0.0],
                          [0.0, 0.0, 0.0, 1.0]], jnp.float32)
    K = jnp.broadcast_to(K_single, (b, 4, 4))

    T = jnp.broadcast_to(jnp.eye(4, dtype=jnp.float32), (b, 4, 4))
    T = T + 0.01 * jax.random.normal(k2, (b, 4, 4), dtype=jnp.float32)
    T = T.at[:, 3, :].set(jnp.array([0.0, 0.0, 0.0, 1.0], jnp.float32))
    return pts, K, T


def _check(grid, depth, pts, K, T, shape):
    b = pts.shape[0]
    h, w = shape
    g_ref, d_ref = project_points_ref(pts, K, T, shape)
    assert grid.shape == (b, h, w, 2) and depth.shape == (b, 1, h, w)
    assert np.allclose(np.asarray(grid), np.asarray(g_ref), atol=1e-4, rtol=1e-4)
    assert np.allclose(np.asarray(depth), np.asarray(d_ref), atol=1e-5, rtol=1e-5)


if __name__ == "__main__":
    key = jax.random.PRNGKey(0)
    key_small, key_med = jax.random.split(key, 2)

    # 1) Small shape, full 4-channel path, single full-extent block per batch.
    b, h, w = 2, 16, 16
    pts, K, T = _make_inputs(key_small, b, h, w)
    grid, depth = project_points(pts, K, T, (h, w))
    jax.block_until_ready((grid, depth))
    _check(grid, depth, pts, K, T, (h, w))

    # 2) Same inputs, homogeneous fast path (channel-3 DMA skipped).
    grid_h, depth_h = project_points(pts, K, T, (h, w), homogeneous=True)
    jax.block_until_ready((grid_h, depth_h))
    _check(grid_h, depth_h, pts, K, T, (h, w))

    # 3) Larger shape forced onto the multi-row-block (divisor) tiling path.
    b2, h2, w2 = 2, 32, 128
    pts2, K2, T2 = _make_inputs(key_med, b2, h2, w2)
    grid2, depth2 = project_points(pts2, K2, T2, (h2, w2),
                                   rows_per_tile=8, homogeneous=True)
    jax.block_until_ready((grid2, depth2))
    _check(grid2, depth2, pts2, K2, T2, (h2, w2))

    print("KERNEL_OK")
</pallas_src>

<mosaic_0001>
module attributes {stable_mosaic.version = 11 : i64} {
  func.func @_project_points_kernel(%arg0: i32, %arg1: i32, %arg2: memref<2x12xf32, #tpu.memory_space<smem>>, %arg3: memref<1x4x2x128xf32, #tpu.memory_space<vmem>>, %arg4: memref<1x2x128xf32, #tpu.memory_space<vmem>>, %arg5: memref<1x2x128xf32, #tpu.memory_space<vmem>>, %arg6: memref<1x2x128xf32, #tpu.memory_space<vmem>>) attributes {dimension_semantics = [#tpu.dimension_semantics<parallel>, #tpu.dimension_semantics<parallel>], iteration_bounds = array<i64: 2, 1>, scalar_prefetch = 0 : i64, scratch_operands = 0 : i64, tpu.core_type = #tpu.core_type<tc>, window_params = [{transform_indices = @transform_0, window_bounds = array<i64: 2, 12>}, {transform_indices = @transform_1, window_bounds = array<i64: 1, 4, 2, 128>}, {transform_indices = @transform_2, window_bounds = array<i64: 1, 2, 128>}, {transform_indices = @transform_3, window_bounds = array<i64: 1, 2, 128>}, {transform_indices = @transform_4, window_bounds = array<i64: 1, 2, 128>}]} {
    %c0 = arith.constant 0 : index
    %c0_0 = arith.constant 0 : index
    %c0_1 = arith.constant 0 : index
    %c0_2 = arith.constant 0 : index
    %0 = vector.load %arg3[%c0, %c0_0, %c0_1, %c0_2] : memref<1x4x2x128xf32, #tpu.memory_space<vmem>>, vector<1x1x2x128xf32>
    %1 = vector.shape_cast %0 : vector<1x1x2x128xf32> to vector<2x128xf32>
    %c0_3 = arith.constant 0 : index
    %c1 = arith.constant 1 : index
    %c0_4 = arith.constant 0 : index
    %c0_5 = arith.constant 0 : index
    %2 = vector.load %arg3[%c0_3, %c1, %c0_4, %c0_5] : memref<1x4x2x128xf32, #tpu.memory_space<vmem>>, vector<1x1x2x128xf32>
    %3 = vector.shape_cast %2 : vector<1x1x2x128xf32> to vector<2x128xf32>
    %c0_6 = arith.constant 0 : index
    %c2 = arith.constant 2 : index
    %c0_7 = arith.constant 0 : index
    %c0_8 = arith.constant 0 : index
    %4 = vector.load %arg3[%c0_6, %c2, %c0_7, %c0_8] : memref<1x4x2x128xf32, #tpu.memory_space<vmem>>, vector<1x1x2x128xf32>
    %5 = vector.shape_cast %4 : vector<1x1x2x128xf32> to vector<2x128xf32>
    %c0_9 = arith.constant 0 : index
    %c3 = arith.constant 3 : index
    %c0_10 = arith.constant 0 : index
    %c0_11 = arith.constant 0 : index
    %6 = vector.load %arg3[%c0_9, %c3, %c0_10, %c0_11] : memref<1x4x2x128xf32, #tpu.memory_space<vmem>>, vector<1x1x2x128xf32>
    %7 = vector.shape_cast %6 : vector<1x1x2x128xf32> to vector<2x128xf32>
    %8 = arith.index_cast %arg0 : i32 to index
    %c8 = arith.constant 8 : index
    %9 = memref.load %arg2[%8, %c8] : memref<2x12xf32, #tpu.memory_space<smem>>
    %10 = vector.broadcast %9 : f32 to vector<2x128xf32>
    %11 = arith.mulf %10, %1 : vector<2x128xf32>
    %12 = arith.index_cast %arg0 : i32 to index
    %c9 = arith.constant 9 : index
    %13 = memref.load %arg2[%12, %c9] : memref<2x12xf32, #tpu.memory_space<smem>>
    %14 = vector.broadcast %13 : f32 to vector<2x128xf32>
    %15 = arith.mulf %14, %3 : vector<2x128xf32>
    %16 = arith.addf %11, %15 : vector<2x128xf32>
    %17 = arith.index_cast %arg0 : i32 to index
    %c10 = arith.constant 10 : index
    %18 = memref.load %arg2[%17, %c10] : memref<2x12xf32, #tpu.memory_space<smem>>
    %19 = vector.broadcast %18 : f32 to vector<2x128xf32>
    %20 = arith.mulf %19, %5 : vector<2x128xf32>
    %21 = arith.addf %16, %20 : vector<2x128xf32>
    %22 = arith.index_cast %arg0 : i32 to index
    %c11 = arith.constant 11 : index
    %23 = memref.load %arg2[%22, %c11] : memref<2x12xf32, #tpu.memory_space<smem>>
    %24 = vector.broadcast %23 : f32 to vector<2x128xf32>
    %25 = arith.mulf %24, %7 : vector<2x128xf32>
    %26 = arith.addf %21, %25 : vector<2x128xf32>
    %27 = arith.index_cast %arg0 : i32 to index
    %c0_12 = arith.constant 0 : index
    %28 = memref.load %arg2[%27, %c0_12] : memref<2x12xf32, #tpu.memory_space<smem>>
    %29 = vector.broadcast %28 : f32 to vector<2x128xf32>
    %30 = arith.mulf %29, %1 : vector<2x128xf32>
    %31 = arith.index_cast %arg0 : i32 to index
    %c1_13 = arith.constant 1 : index
    %32 = memref.load %arg2[%31, %c1_13] : memref<2x12xf32, #tpu.memory_space<smem>>
    %33 = vector.broadcast %32 : f32 to vector<2x128xf32>
    %34 = arith.mulf %33, %3 : vector<2x128xf32>
    %35 = arith.addf %30, %34 : vector<2x128xf32>
    %36 = arith.index_cast %arg0 : i32 to index
    %c2_14 = arith.constant 2 : index
    %37 = memref.load %arg2[%36, %c2_14] : memref<2x12xf32, #tpu.memory_space<smem>>
    %38 = vector.broadcast %37 : f32 to vector<2x128xf32>
    %39 = arith.mulf %38, %5 : vector<2x128xf32>
    %40 = arith.addf %35, %39 : vector<2x128xf32>
    %41 = arith.index_cast %arg0 : i32 to index
    %c3_15 = arith.constant 3 : index
    %42 = memref.load %arg2[%41, %c3_15] : memref<2x12xf32, #tpu.memory_space<smem>>
    %43 = vector.broadcast %42 : f32 to vector<2x128xf32>
    %44 = arith.mulf %43, %7 : vector<2x128xf32>
    %45 = arith.addf %40, %44 : vector<2x128xf32>
    %46 = arith.index_cast %arg0 : i32 to index
    %c4 = arith.constant 4 : index
    %47 = memref.load %arg2[%46, %c4] : memref<2x12xf32, #tpu.memory_space<smem>>
    %48 = vector.broadcast %47 : f32 to vector<2x128xf32>
    %49 = arith.mulf %48, %1 : vector<2x128xf32>
    %50 = arith.index_cast %arg0 : i32 to index
    %c5 = arith.constant 5 : index
    %51 = memref.load %arg2[%50, %c5] : memref<2x12xf32, #tpu.memory_space<smem>>
    %52 = vector.broadcast %51 : f32 to vector<2x128xf32>
    %53 = arith.mulf %52, %3 : vector<2x128xf32>
    %54 = arith.addf %49, %53 : vector<2x128xf32>
    %55 = arith.index_cast %arg0 : i32 to index
    %c6 = arith.constant 6 : index
    %56 = memref.load %arg2[%55, %c6] : memref<2x12xf32, #tpu.memory_space<smem>>
    %57 = vector.broadcast %56 : f32 to vector<2x128xf32>
    %58 = arith.mulf %57, %5 : vector<2x128xf32>
    %59 = arith.addf %54, %58 : vector<2x128xf32>
    %60 = arith.index_cast %arg0 : i32 to index
    %c7 = arith.constant 7 : index
    %61 = memref.load %arg2[%60, %c7] : memref<2x12xf32, #tpu.memory_space<smem>>
    %62 = vector.broadcast %61 : f32 to vector<2x128xf32>
    %63 = arith.mulf %62, %7 : vector<2x128xf32>
    %64 = arith.addf %59, %63 : vector<2x128xf32>
    %cst = arith.constant 1.1920929E-7 : f32
    %65 = vector.broadcast %cst : f32 to vector<2x128xf32>
    %66 = arith.maximumf %26, %65 : vector<2x128xf32>
    %c0_16 = arith.constant 0 : index
    %c0_17 = arith.constant 0 : index
    %c0_18 = arith.constant 0 : index
    %67 = vector.load %arg6[%c0_16, %c0_17, %c0_18] : memref<1x2x128xf32, #tpu.memory_space<vmem>>, vector<1x2x128xf32>
    %68 = vector.shape_cast %67 : vector<1x2x128xf32> to vector<2x128xf32>
    %69 = vector.shape_cast %66 : vector<2x128xf32> to vector<1x2x128xf32>
    tpu.vector_store %arg6[%c0_16, %c0_17, %c0_18], %69 {strides = array<i32>} : memref<1x2x128xf32, #tpu.memory_space<vmem>>, vector<1x2x128xf32>,
    %cst_19 = arith.constant 1.000000e-01 : f32
    %70 = vector.broadcast %cst_19 : f32 to vector<2x128xf32>
    %71 = arith.maximumf %26, %70 : vector<2x128xf32>
    %72 = tpu.reciprocal %71 : vector<2x128xf32> -> vector<2x128xf32>
    %73 = arith.mulf %45, %72 : vector<2x128xf32>
    %cst_20 = arith.constant 1.000000e+00 : f32
    %74 = vector.broadcast %cst_20 : f32 to vector<2x128xf32>
    %75 = arith.subf %73, %74 : vector<2x128xf32>
    %c0_21 = arith.constant 0 : index
    %c0_22 = arith.constant 0 : index
    %c0_23 = arith.constant 0 : index
    %76 = vector.load %arg4[%c0_21, %c0_22, %c0_23] : memref<1x2x128xf32, #tpu.memory_space<vmem>>, vector<1x2x128xf32>
    %77 = vector.shape_cast %76 : vector<1x2x128xf32> to vector<2x128xf32>
    %78 = vector.shape_cast %75 : vector<2x128xf32> to vector<1x2x128xf32>
    tpu.vector_store %arg4[%c0_21, %c0_22, %c0_23], %78 {strides = array<i32>} : memref<1x2x128xf32, #tpu.memory_space<vmem>>, vector<1x2x128xf32>,
    %79 = arith.mulf %64, %72 : vector<2x128xf32>
    %cst_24 = arith.constant 1.000000e+00 : f32
    %80 = vector.broadcast %cst_24 : f32 to vector<2x128xf32>
    %81 = arith.subf %79, %80 : vector<2x128xf32>
    %c0_25 = arith.constant 0 : index
    %c0_26 = arith.constant 0 : index
    %c0_27 = arith.constant 0 : index
    %82 = vector.load %arg5[%c0_25, %c0_26, %c0_27] : memref<1x2x128xf32, #tpu.memory_space<vmem>>, vector<1x2x128xf32>
    %83 = vector.shape_cast %82 : vector<1x2x128xf32> to vector<2x128xf32>
    %84 = vector.shape_cast %81 : vector<2x128xf32> to vector<1x2x128xf32>
    tpu.vector_store %arg5[%c0_25, %c0_26, %c0_27], %84 {strides = array<i32>} : memref<1x2x128xf32, #tpu.memory_space<vmem>>, vector<1x2x128xf32>,
    return
  }
  func.func @transform_0(%arg0: i32, %arg1: i32) -> (i32, i32) {
    %c0_i32 = arith.constant 0 : i32
    %c0_i32_0 = arith.constant 0 : i32
    %c0_i32_1 = arith.constant 0 : i32
    return %c0_i32, %c0_i32_0 : i32, i32
  }
  func.func @transform_1(%arg0: i32, %arg1: i32) -> (i32, i32, i32, i32) {
    %c0_i32 = arith.constant 0 : i32
    %c0_i32_0 = arith.constant 0 : i32
    %c0_i32_1 = arith.constant 0 : i32
    return %arg0, %c0_i32, %arg1, %c0_i32_0 : i32, i32, i32, i32
  }
  func.func @transform_2(%arg0: i32, %arg1: i32) -> (i32, i32, i32) {
    %c0_i32 = arith.constant 0 : i32
    %c0_i32_0 = arith.constant 0 : i32
    return %arg0, %arg1, %c0_i32 : i32, i32, i32
  }
  func.func @transform_3(%arg0: i32, %arg1: i32) -> (i32, i32, i32) {
    %c0_i32 = arith.constant 0 : i32
    %c0_i32_0 = arith.constant 0 : i32
    return %arg0, %arg1, %c0_i32 : i32, i32, i32
  }
  func.func @transform_4(%arg0: i32, %arg1: i32) -> (i32, i32, i32) {
    %c0_i32 = arith.constant 0 : i32
    %c0_i32_0 = arith.constant 0 : i32
    return %arg0, %arg1, %c0_i32 : i32, i32, i32
  }
}

</mosaic_0001>

<llo_original>
// kernel: tpu_custom_call.1
$region0: #{tpu_custom_call.1}
  #allocation0 [shape = 'u32[]', space=smem, size = 0x4, offset = 0x4, fixed_abs, tag = 'smem constant byte address 0x4 - core index']
  #allocation1 [shape = 'u32[72,128]{1,0:T(1,128)}', space=vmem, size = 0x9000, scoped, tag = 'internal scratch']
  %s0 = inlined_call_operand.hbm [shape: f32[2,12], index: 0, kind: input, shape index: {}]
  %s1 = inlined_call_operand.hbm [shape: f32[2,4,2,128], index: 1, kind: input, shape index: {}]
  %s2 = inlined_call_operand.hbm [shape: f32[2,2,128], index: 2, kind: output, shape index: {0}]
  %s3 = inlined_call_operand.hbm [shape: f32[2,2,128], index: 3, kind: output, shape index: {1}]
  %s4 = inlined_call_operand.hbm [shape: f32[2,2,128], index: 4, kind: output, shape index: {2}]
  %5 = xla_tuple %s2, %s3, %s4
  %s6 = sld [smem:[#allocation0]]
  $region65: #{tpu_custom_call.1} parent=0
    _
  %s8 = ssub.s32 1, %s6
  %s9 = scalar_select 0, %s8, %s6
  $region1: #{tpu_custom_call.1} parent=0
    #allocation2 [shape = 'u8[1024]{0}', space=smem, size = 0x400, scoped, tag = 'input window, operand 0, single buffered']
    #allocation3 [shape = 's32[2]{0}', space=sflag, size = 0x8, scoped, tag = 'scoped memory for tpu_custom_call.1']
    #allocation4 [shape = 's32[2]{0}', space=sflag, size = 0x8, scoped, tag = 'scoped memory for tpu_custom_call.1']
    #allocation5 [shape = 's32[2]{0}', space=sflag, size = 0x8, scoped, tag = 'scoped memory for tpu_custom_call.1']
    #allocation6 [shape = 'u8[8192]{0}', space=vmem, size = 0x2000, scoped, tag = 'input window, operand 1']
    #allocation7 [shape = 'u8[2048]{0}', space=vmem, size = 0x800, scoped, tag = 'output window, operand 0']
    #allocation8 [shape = 'u8[2048]{0}', space=vmem, size = 0x800, scoped, tag = 'output window, operand 1']
    #allocation9 [shape = 's32[2]{0}', space=sflag, size = 0x8, scoped, tag = 'scoped memory for tpu_custom_call.1']
    #allocation10 [shape = 'u8[2048]{0}', space=vmem, size = 0x800, scoped, tag = 'output window, operand 2']
    %10 = vsyncpa [#allocation5], 0
    %11 = vsyncpa [#allocation3], 0
    %s12 = scalar_lea.sflag [#allocation3], 1
    %13 = vsyncpa %s12, 0
    %14 = vsyncpa [#allocation4], 0
    %s15 = scalar_lea.sflag [#allocation4], 1
    %16 = vsyncpa %s15, 0
    %17 = vsyncpa [#allocation9], 0
    %s18 = scalar_lea.sflag [#allocation9], 1
    %19 = vsyncpa %s18, 0
    loop: start=0, step=1, limit=4
    $region2: #{tpu_custom_call.1} parent=1 // loop_pre_header
      _
    $region3: #{tpu_custom_call.1} parent=1 // loop_header
      %s21 = sphi 0, %s25
      %p22 = scmp.ge.s32.totalorder %s21, 4
      %s28 = sphi 0, %s40
      %s29 = sphi 0, %s36
      %s30 = sphi 0, %s28
      %s31 = sphi 0, %s29
      %s32 = sphi 0, %s30
      %s33 = sphi 0, %s31
      %s41 = sphi 0, %s41
      %s43 = sphi 0, %s41
      %s44 = sphi 0, %s43
      %s58 = sphi 0, %s44
      %s66 = sphi 0, %s68
      %s69 = sphi 0, %s66
      %s70 = sphi 0, %s69
      %s86 = sphi 0, %s70
      %s94 = sphi 0, %s96
      %s97 = sphi 0, %s94
      %s98 = sphi 0, %s97
      %s114 = sphi 0, %s98
      %s122 = sphi 0, %s124
      %s125 = sphi 0, %s122
      %s126 = sphi 0, %s125
      %s142 = sphi 0, %s126
      %s150 = sphi 0, %s152
      %s153 = sphi 0, %s150
      %s154 = sphi 0, %s153
      %s170 = sphi 0, %s154
    $region4: #{tpu_custom_call.1} parent=1 // loop_header_branch
      %24 = sbr.rel (%p22) target = $region8
    $region5: #{tpu_custom_call.1} parent=1 // loop_body
      %s26 = ssub.s32 %s21, 1
      %s27 = ssub.s32 %s21, 2
      %s34 = sadd.s32 1, %s29
      %p35 = scmp.ge.s32.totalorder %s34, 1
      %s36 = scalar_select %p35, 0, %s34
      %s37 = sadd.s32 1, %s28
      %s38 = scalar_select %p35, %s37, %s28
      %p39 = scmp.ge.s32.totalorder %s38, 2
      %s40 = scalar_select %p39, 0, %s38
      %s42 = sadd.s32 %s41, 1
      %p45 = scmp.eq.s32.totalorder %s21, 1
      %p46 = scmp.ne.s32.totalorder %s41, %s43
      %p47 = scmp.eq.s32.totalorder %s21, 0
      %p48 = por %p46, %p47
      %p49 = scmp.ne.s32.totalorder %s41, %s43
      %p50 = scmp.eq.s32.totalorder %s26, 1
      %p51 = por %p49, %p50
      %p52 = scmp.ne.s32.totalorder %s43, %s44
      %p53 = scmp.eq.s32.totalorder %s26, 0
      %p54 = por %p52, %p53
      %p55 = scmp.ne.s32.totalorder %s43, %s44
      %p56 = scmp.eq.s32.totalorder %s27, 1
      %p57 = por %p55, %p56
      %p59 = scmp.ne.s32.totalorder %s44, %s58
      %p60 = scmp.eq.s32.totalorder %s27, 0
      %p61 = por %p59, %p60
      %s62 = ssub.s32 %s28, %s40
      %s63 = ssub.s32 %s29, %s36
      %s64 = sor.u32 %s62, %s63
      %p65 = scmp.eq.s32.totalorder %s64, 0
      %s67 = sadd.s32 %s66, 1
      %s68 = scalar_select %p65, %s66, %s67
      %p71 = pneg %p65
      %p72 = scmp.eq.s32.totalorder %s21, 1
      %p73 = por %p71, %p72
      %p74 = scmp.ne.s32.totalorder %s66, %s69
      %p75 = scmp.eq.s32.totalorder %s21, 0
      %p76 = por %p74, %p75
      %p77 = scmp.ne.s32.totalorder %s66, %s69
      %p78 = scmp.eq.s32.totalorder %s26, 1
      %p79 = por %p77, %p78
      %p80 = scmp.ne.s32.totalorder %s69, %s70
      %p81 = scmp.eq.s32.totalorder %s26, 0
      %p82 = por %p80, %p81
      %p83 = scmp.ne.s32.totalorder %s69, %s70
      %p84 = scmp.eq.s32.totalorder %s27, 1
      %p85 = por %p83, %p84
      %p87 = scmp.ne.s32.totalorder %s70, %s86
      %p88 = scmp.eq.s32.totalorder %s27, 0
      %p89 = por %p87, %p88
      %s90 = ssub.s32 %s28, %s40
      %s91 = ssub.s32 %s29, %s36
      %s92 = sor.u32 %s90, %s91
      %p93 = scmp.eq.s32.totalorder %s92, 0
      %s95 = sadd.s32 %s94, 1
      %s96 = scalar_select %p93, %s94, %s95
      %p99 = pneg %p93
      %p100 = scmp.eq.s32.totalorder %s21, 1
      %p101 = por %p99, %p100
      %p102 = scmp.ne.s32.totalorder %s94, %s97
      %p103 = scmp.eq.s32.totalorder %s21, 0
      %p104 = por %p102, %p103
      %p105 = scmp.ne.s32.totalorder %s94, %s97
      %p106 = scmp.eq.s32.totalorder %s26, 1
      %p107 = por %p105, %p106
      %p108 = scmp.ne.s32.totalorder %s97, %s98
      %p109 = scmp.eq.s32.totalorder %s26, 0
      %p110 = por %p108, %p109
      %p111 = scmp.ne.s32.totalorder %s97, %s98
      %p112 = scmp.eq.s32.totalorder %s27, 1
      %p113 = por %p111, %p112
      %p115 = scmp.ne.s32.totalorder %s98, %s114
      %p116 = scmp.eq.s32.totalorder %s27, 0
      %p117 = por %p115, %p116
      %s118 = ssub.s32 %s28, %s40
      %s119 = ssub.s32 %s29, %s36
      %s120 = sor.u32 %s118, %s119
      %p121 = scmp.eq.s32.totalorder %s120, 0
      %s123 = sadd.s32 %s122, 1
      %s124 = scalar_select %p121, %s122, %s123
      %p127 = pneg %p121
      %p128 = scmp.eq.s32.totalorder %s21, 1
      %p129 = por %p127, %p128
      %p130 = scmp.ne.s32.totalorder %s122, %s125
      %p131 = scmp.eq.s32.totalorder %s21, 0
      %p132 = por %p130, %p131
      %p133 = scmp.ne.s32.totalorder %s122, %s125
      %p134 = scmp.eq.s32.totalorder %s26, 1
      %p135 = por %p133, %p134
      %p136 = scmp.ne.s32.totalorder %s125, %s126
      %p137 = scmp.eq.s32.totalorder %s26, 0
      %p138 = por %p136, %p137
      %p139 = scmp.ne.s32.totalorder %s125, %s126
      %p140 = scmp.eq.s32.totalorder %s27, 1
      %p141 = por %p139, %p140
      %p143 = scmp.ne.s32.totalorder %s126, %s142
      %p144 = scmp.eq.s32.totalorder %s27, 0
      %p145 = por %p143, %p144
      %s146 = ssub.s32 %s28, %s40
      %s147 = ssub.s32 %s29, %s36
      %s148 = sor.u32 %s146, %s147
      %p149 = scmp.eq.s32.totalorder %s148, 0
      %s151 = sadd.s32 %s150, 1
      %s152 = scalar_select %p149, %s150, %s151
      %p155 = pneg %p149
      %p156 = scmp.eq.s32.totalorder %s21, 1
      %p157 = por %p155, %p156
      %p158 = scmp.ne.s32.totalorder %s150, %s153
      %p159 = scmp.eq.s32.totalorder %s21, 0
      %p160 = por %p158, %p159
      %p161 = scmp.ne.s32.totalorder %s150, %s153
      %p162 = scmp.eq.s32.totalorder %s26, 1
      %p163 = por %p161, %p162
      %p164 = scmp.ne.s32.totalorder %s153, %s154
      %p165 = scmp.eq.s32.totalorder %s26, 0
      %p166 = por %p164, %p165
      %p167 = scmp.ne.s32.totalorder %s153, %s154
      %p168 = scmp.eq.s32.totalorder %s27, 1
      %p169 = por %p167, %p168
      %p171 = scmp.ne.s32.totalorder %s154, %s170
      %p172 = scmp.eq.s32.totalorder %s27, 0
      %p173 = por %p171, %p172
      %p174 = scmp.le.s32.totalorder 1, %s21
      %p175 = scmp.lt.s32.totalorder %s21, 3
      %p176 = pnand %p174, %p175
      %p177 = pneg %p176
      // Predicated region
      $region9: #{tpu_custom_call.1} parent=5 // pred_check
        _
      $region10: #{tpu_custom_call.1} parent=5 // pred_check_branch
        %179 = sbr.rel (%p176) target = $region12
      $region11: #{tpu_custom_call.1} parent=5 // pred_region
        %s180 = ssub.s32 %s21, 1
        // Predicated region
        $region13: #{tpu_custom_call.1} parent=11 // pred_check
          %p181 = pneg %p54
        $region14: #{tpu_custom_call.1} parent=11 // pred_check_branch
          %183 = sbr.rel (%p181) target = $region16
        $region15: #{tpu_custom_call.1} parent=11 // pred_region
          %185 = vsyncadd [#allocation5], 0
          %s187 = sshll.u32 %s0, 4
          %s188 = int_to_ptr.hbm [resolvable:$true] %s187
          %190 = dma.hbm_to_smem %s188, 32, [#allocation2], [#allocation5]
        $region16: #{tpu_custom_call.1} parent=11 // pred_fallthru
          _
      $region12: #{tpu_custom_call.1} parent=5 // pred_fallthru
        _
      %p191 = scmp.lt.s32.totalorder %s21, 2
      // Predicated region
      $region17: #{tpu_custom_call.1} parent=5 // pred_check
        %p192 = pneg %p191
      $region18: #{tpu_custom_call.1} parent=5 // pred_check_branch
        %194 = sbr.rel (%p192) target = $region20
      $region19: #{tpu_custom_call.1} parent=5 // pred_region
        // Predicated region
        $region21: #{tpu_custom_call.1} parent=19 // pred_check
          %p195 = pneg %p76
        $region22: #{tpu_custom_call.1} parent=19 // pred_check_branch
          %197 = sbr.rel (%p195) target = $region24
        $region23: #{tpu_custom_call.1} parent=19 // pred_region
          %s198 = sand.u32 %s66, 1
          %s199 = scalar_lea.sflag [#allocation3], %s198
          %s200 = sand.u32 %s66, 1
          %s201 = smul.addr %s200, 8
          %s202 = scalar_lea.vmem [#allocation6], %s201
          %204 = vsyncadd %s199, 0
          %s205 = smul.addr %s28, 4
          %s206 = sadd.s32 %s29, %s205
          %s207 = smul.addr %s206, 2
          %s208 = scalar_lea.hbm %s1, %s207
          %s209 = sshll.u32 %s208, 4
          %s210 = int_to_ptr.hbm [resolvable:$true] %s209
          %s211 = sshll.u32 %s202, 4
          %s212 = int_to_ptr.vmem [resolvable:$true] %s211
          %217 = dma.hbm_to_vmem [thread:$0]  %s210, 128, %s212, %s199, 32, 32, 2
        $region24: #{tpu_custom_call.1} parent=19 // pred_fallthru
          _
      $region20: #{tpu_custom_call.1} parent=5 // pred_fallthru
        _
      %p218 = scmp.le.s32.totalorder 1, %s21
      %p219 = scmp.lt.s32.totalorder %s21, 3
      %p220 = pnand %p218, %p219
      %p221 = pneg %p220
      // Predicated region
      $region25: #{tpu_custom_call.1} parent=5 // pred_check
        _
      $region26: #{tpu_custom_call.1} parent=5 // pred_check_branch
        %223 = sbr.rel (%p220) target = $region28
      $region27: #{tpu_custom_call.1} parent=5 // pred_region
        %s224 = ssub.s32 %s21, 1
        // Predicated region
        $region29: #{tpu_custom_call.1} parent=27 // pred_check
          %p225 = pneg %p54
        $region30: #{tpu_custom_call.1} parent=27 // pred_check_branch
          %227 = sbr.rel (%p225) target = $region32
        $region31: #{tpu_custom_call.1} parent=27 // pred_region
          %229 = dma.done [#allocation5], 32
        $region32: #{tpu_custom_call.1} parent=27 // pred_fallthru
          _
        %s230 = sand.u32 %s69, 1
        %s231 = scalar_lea.sflag [#allocation3], %s230
        %s232 = sand.u32 %s69, 1
        %s233 = smul.addr %s232, 8
        %s234 = scalar_lea.vmem [#allocation6], %s233
        // Predicated region
        $region33: #{tpu_custom_call.1} parent=27 // pred_check
          %p235 = pneg %p82
        $region34: #{tpu_custom_call.1} parent=27 // pred_check_branch
          %237 = sbr.rel (%p235) target = $region36
        $region35: #{tpu_custom_call.1} parent=27 // pred_region
          %239 = dma.done %s231, 128
        $region36: #{tpu_custom_call.1} parent=27 // pred_fallthru
          _
        %240 = sfence
        %p241 = pneg %p54
        %p242 = pneg %p51
        %s243 = sand.u32 %s69, 1
        %s244 = scalar_lea.sflag [#allocation3], %s243
        %s245 = sand.u32 %s69, 1
        %s246 = smul.addr %s245, 8
        %s247 = scalar_lea.vmem [#allocation6], %s246
        %p248 = pneg %p82
        %p249 = pneg %p79
        %p250 = pneg %p110
        %p251 = pneg %p107
        %s252 = sand.u32 %s97, 1
        %s253 = scalar_lea.sflag [#allocation4], %s252
        %s254 = sand.u32 %s97, 1
        %s255 = smul.addr %s254, 2
        %s256 = scalar_lea.vmem [#allocation7], %s255
        %p257 = pneg %p138
        %p258 = pneg %p135
        %s259 = sand.u32 %s26, 1
        %s260 = scalar_lea.sflag [#allocation9], %s259
        %s261 = sand.u32 %s125, 1
        %s262 = smul.addr %s261, 2
        %s263 = scalar_lea.vmem [#allocation8], %s262
        %p264 = pneg %p166
        %p265 = pneg %p163
        %s266 = sand.u32 %s26, 1
        %s267 = scalar_lea.sflag [#allocation9], %s266
        %s268 = sand.u32 %s153, 1
        %s269 = smul.addr %s268, 2
        %s270 = scalar_lea.vmem [#allocation10], %s269
        %v271 = vld [vmem:[%s234] sm:$0x3]
        %s272 = scalar_lea.vmem %s234, 2 [#allocation6]
        %v273 = vld [vmem:[%s272] sm:$0x3]
        %s274 = scalar_lea.vmem %s234, 4 [#allocation6]
        %v275 = vld [vmem:[%s274] sm:$0x3]
        %s276 = scalar_lea.vmem %s234, 6 [#allocation6]
        %v277 = vld [vmem:[%s276] sm:$0x3]
        %s278 = smul.u32 %s30, 128
        %s279 = sadd.s32 %s278, 8
        %s280 = sld [smem:[#allocation2 + %s279]]
        %v281 = vstv %s280
        %v282 = vmul.f32 %v281, %v271
        %s283 = sadd.s32 %s278, 9
        %s284 = sld [smem:[#allocation2 + %s283]]
        %v285 = vstv %s284
        %v286 = vmul.f32 %v285, %v273
        %v287 = vadd.f32 %v282, %v286
        %s288 = sadd.s32 %s278, 10
        %s289 = sld [smem:[#allocation2 + %s288]]
        %v290 = vstv %s289
        %v291 = vmul.f32 %v290, %v275
        %v292 = vadd.f32 %v287, %v291
        %s293 = sadd.s32 %s278, 11
        %s294 = sld [smem:[#allocation2 + %s293]]
        %v295 = vstv %s294
        %v296 = vmul.f32 %v295, %v277
        %v297 = vadd.f32 %v292, %v296
        %s298 = sld [smem:[#allocation2 + %s278]]
        %v299 = vstv %s298
        %v300 = vmul.f32 %v299, %v271
        %s301 = sadd.s32 %s278, 1
        %s302 = sld [smem:[#allocation2 + %s301]]
        %v303 = vstv %s302
        %v304 = vmul.f32 %v303, %v273
        %v305 = vadd.f32 %v300, %v304
        %s306 = sadd.s32 %s278, 2
        %s307 = sld [smem:[#allocation2 + %s306]]
        %v308 = vstv %s307
        %v309 = vmul.f32 %v308, %v275
        %v310 = vadd.f32 %v305, %v309
        %s311 = sadd.s32 %s278, 3
        %s312 = sld [smem:[#allocation2 + %s311]]
        %v313 = vstv %s312
        %v314 = vmul.f32 %v313, %v277
        %v315 = vadd.f32 %v310, %v314
        %s316 = sadd.s32 %s278, 4
        %s317 = sld [smem:[#allocation2 + %s316]]
        %v318 = vstv %s317
        %v319 = vmul.f32 %v318, %v271
        %s320 = sadd.s32 %s278, 5
        %s321 = sld [smem:[#allocation2 + %s320]]
        %v322 = vstv %s321
        %v323 = vmul.f32 %v322, %v273
        %v324 = vadd.f32 %v319, %v323
        %s325 = sadd.s32 %s278, 6
        %s326 = sld [smem:[#allocation2 + %s325]]
        %v327 = vstv %s326
        %v328 = vmul.f32 %v327, %v275
        %v329 = vadd.f32 %v324, %v328
        %s330 = sadd.s32 %s278, 7
        %s331 = sld [smem:[#allocation2 + %s330]]
        %v332 = vstv %s331
        %v333 = vmul.f32 %v332, %v277
        %v334 = vadd.f32 %v329, %v333
        %v335 = vmax.f32 %v297, 1.1920929e-07
        %336 = vst [vmem:[%s270] sm:$0x3] %v335
        %v337 = vmax.f32 %v297, 0.1
        %v338 = vrcp.pop %v337
        %v339 = vmul.f32 %v337, %v338
        %v340 = vsub.f32 1.0, %v339
        %v341 = vmul.f32 %v338, %v340
        %v342 = vadd.f32 %v338, %v341
        %vm343 = vweird.f32 %v337
        %vm344 = vweird.f32 %v338
        %vm345 = vmor %vm343, %vm344
        %v346 = vsel %vm345, %v338, %v342
        %v347 = vand.u32 2147483647, %v337
        %vm348 = vcmp.eq.f32.partialorder %v347, 8.507059e+37
        %v349 = vand.u32 %v337, 2147483648
        %v350 = vor.u32 1.1754944e-38, %v349
        %v351 = vsel %vm348, %v350, %v346
        %v352 = vmul.f32 %v315, %v351
        %v353 = vsub.f32 %v352, 1.0
        %354 = vst [vmem:[%s256] sm:$0x3] %v353
        %v355 = vmul.f32 %v334, %v351
        %v356 = vsub.f32 %v355, 1.0
        %357 = vst [vmem:[%s263] sm:$0x3] %v356
        %s358 = sand.u32 %s97, 1
        %s359 = scalar_lea.sflag [#allocation4], %s358
        %s360 = sand.u32 %s97, 1
        %s361 = smul.addr %s360, 2
        %s362 = scalar_lea.vmem [#allocation7], %s361
        %s363 = sand.u32 %s26, 1
        %s364 = scalar_lea.sflag [#allocation9], %s363
        %s365 = sand.u32 %s125, 1
        %s366 = smul.addr %s365, 2
        %s367 = scalar_lea.vmem [#allocation8], %s366
        %s368 = sand.u32 %s26, 1
        %s369 = scalar_lea.sflag [#allocation9], %s368
        %s370 = sand.u32 %s153, 1
        %s371 = smul.addr %s370, 2
        %s372 = scalar_lea.vmem [#allocation10], %s371
        // Predicated region
        $region37: #{tpu_custom_call.1} parent=27 // pred_check
          %p373 = pneg %p107
        $region38: #{tpu_custom_call.1} parent=27 // pred_check_branch
          %375 = sbr.rel (%p373) target = $region40
        $region39: #{tpu_custom_call.1} parent=27 // pred_region
          %377 = vsyncadd %s359, 0
          %s378 = sadd.s32 %s31, %s30
          %s379 = smul.addr %s378, 2
          %s380 = scalar_lea.hbm %s2, %s379
          %s382 = sshll.u32 %s362, 4
          %s383 = int_to_ptr.vmem [resolvable:$true] %s382
          %s384 = sshll.u32 %s380, 4
          %s385 = int_to_ptr.hbm [resolvable:$true] %s384
          %387 = dma.vmem_to_hbm [thread:$0]  %s383, 32, %s385, %s359
        $region40: #{tpu_custom_call.1} parent=27 // pred_fallthru
          _
        // Predicated region
        $region41: #{tpu_custom_call.1} parent=27 // pred_check
          %p388 = pneg %p135
        $region42: #{tpu_custom_call.1} parent=27 // pred_check_branch
          %390 = sbr.rel (%p388) target = $region44
        $region43: #{tpu_custom_call.1} parent=27 // pred_region
          %392 = vsyncadd %s364, 0
          %s393 = sadd.s32 %s31, %s30
          %s394 = smul.addr %s393, 2
          %s395 = scalar_lea.hbm %s3, %s394
          %s397 = sshll.u32 %s367, 4
          %s398 = int_to_ptr.vmem [resolvable:$true] %s397
          %s399 = sshll.u32 %s395, 4
          %s400 = int_to_ptr.hbm [resolvable:$true] %s399
          %402 = dma.vmem_to_hbm [thread:$0]  %s398, 32, %s400, %s364
        $region44: #{tpu_custom_call.1} parent=27 // pred_fallthru
          _
        // Predicated region
        $region45: #{tpu_custom_call.1} parent=27 // pred_check
          %p403 = pneg %p163
        $region46: #{tpu_custom_call.1} parent=27 // pred_check_branch
          %405 = sbr.rel (%p403) target = $region48
        $region47: #{tpu_custom_call.1} parent=27 // pred_region
          %407 = vsyncadd %s369, 0
          %s408 = sadd.s32 %s31, %s30
          %s409 = smul.addr %s408, 2
          %s410 = scalar_lea.hbm %s4, %s409
          %s412 = sshll.u32 %s372, 4
          %s413 = int_to_ptr.vmem [resolvable:$true] %s412
          %s414 = sshll.u32 %s410, 4
          %s415 = int_to_ptr.hbm [resolvable:$true] %s414
          %417 = dma.vmem_to_hbm [thread:$0]  %s413, 32, %s415, %s369
        $region48: #{tpu_custom_call.1} parent=27 // pred_fallthru
          _
      $region28: #{tpu_custom_call.1} parent=5 // pred_fallthru
        _
      %p418 = scmp.le.s32.totalorder 2, %s21
      // Predicated region
      $region49: #{tpu_custom_call.1} parent=5 // pred_check
        %p419 = pneg %p418
      $region50: #{tpu_custom_call.1} parent=5 // pred_check_branch
        %421 = sbr.rel (%p419) target = $region52
      $region51: #{tpu_custom_call.1} parent=5 // pred_region
        %s422 = ssub.s32 %s21, 2
        // Predicated region
        $region53: #{tpu_custom_call.1} parent=51 // pred_check
          %p423 = pneg %p113
        $region54: #{tpu_custom_call.1} parent=51 // pred_check_branch
          %425 = sbr.rel (%p423) target = $region56
        $region55: #{tpu_custom_call.1} parent=51 // pred_region
          %s426 = sand.u32 %s98, 1
          %s427 = scalar_lea.sflag [#allocation4], %s426
          %s428 = sand.u32 %s98, 1
          %s429 = smul.addr %s428, 2
          %s430 = scalar_lea.vmem [#allocation7], %s429
          %432 = dma.done %s427, 32
        $region56: #{tpu_custom_call.1} parent=51 // pred_fallthru
          _
        // Predicated region
        $region57: #{tpu_custom_call.1} parent=51 // pred_check
          %p433 = pneg %p141
        $region58: #{tpu_custom_call.1} parent=51 // pred_check_branch
          %435 = sbr.rel (%p433) target = $region60
        $region59: #{tpu_custom_call.1} parent=51 // pred_region
          %s436 = sand.u32 %s27, 1
          %s437 = scalar_lea.sflag [#allocation9], %s436
          %s438 = sand.u32 %s126, 1
          %s439 = smul.addr %s438, 2
          %s440 = scalar_lea.vmem [#allocation8], %s439
          %442 = dma.done %s437, 32
        $region60: #{tpu_custom_call.1} parent=51 // pred_fallthru
          _
        // Predicated region
        $region61: #{tpu_custom_call.1} parent=51 // pred_check
          %p443 = pneg %p169
        $region62: #{tpu_custom_call.1} parent=51 // pred_check_branch
          %445 = sbr.rel (%p443) target = $region64
        $region63: #{tpu_custom_call.1} parent=51 // pred_region
          %s446 = sand.u32 %s27, 1
          %s447 = scalar_lea.sflag [#allocation9], %s446
          %s448 = sand.u32 %s154, 1
          %s449 = smul.addr %s448, 2
          %s450 = scalar_lea.vmem [#allocation10], %s449
          %452 = dma.done %s447, 32
        $region64: #{tpu_custom_call.1} parent=51 // pred_fallthru
          _
      $region52: #{tpu_custom_call.1} parent=5 // pred_fallthru
        _
    $region6: #{tpu_custom_call.1} parent=1 // loop_footer
      %s25 = sadd.s32 1, %s21
    $region7: #{tpu_custom_call.1} parent=1 // loop_footer_branch
      %20 = sbr.rel target = $region3
    $region8: #{tpu_custom_call.1} parent=1 // loop_exit
      _
    %453 = vsyncpa [#allocation3], 1
    %s454 = scalar_lea.sflag [#allocation3], 1
    %455 = vsyncpa %s454, 1
    %456 = vsyncpa [#allocation4], 1
    %s457 = scalar_lea.sflag [#allocation4], 1
    %458 = vsyncpa %s457, 1
    %459 = vsyncpa [#allocation9], 1
    %s460 = scalar_lea.sflag [#allocation9], 1
    %461 = vsyncpa %s460, 1
    %462 = vsyncpa [#allocation5], 1
    %s463 = scalar_lea.sflag [#allocation5], 1
    %464 = vsyncpa %s463, 1

</llo_original>
